<compile_context>
chip_gen: v5e
topology: v5e:2x2
jax: 0.10.0
libtpu: 0.0.40
codegen_flags: <defaults>
</compile_context>

<pallas_src>
import functools

import numpy as np

import jax
import jax.numpy as jnp
from jax.experimental import pallas as pl
from jax.experimental.pallas import tpu as pltpu


# ----------------------------- static tap layout --------------------------- #
def _live_taps(width):
    """Statically-live 3x3 taps (kh, kw, row_shift) for the flattened
    (b, h_pad, w_pad) slab.  For width == 1 the kw != 1 taps always read zero
    padding and are dropped at pack/trace time."""
    wp = width if width == 1 else width + 2
    kws = (1,) if width == 1 else (0, 1, 2)
    return tuple((kh, kw, (kh - 1) * wp + (kw - 1))
                 for kh in (0, 1, 2) for kw in kws)


# --------------------------------- kernel ---------------------------------- #
def _nn_kernel(mask_ref, x_ref, w_in_ref, w_m1_ref, w_m2_ref, w_out_ref,
               b_ref, o_ref, *, n_interior, shifts):
    eps = 1e-5
    inv_n = 1.0 / float(n_interior)
    mask = mask_ref[...]                                    # [Np_pad, 1]

    def shift_rows(a, s):
        # result[i] = a[i + s].  The rows that wrap around are non-interior
        # rows of `a`, which are zero by the masking invariant below, so a
        # rotate is exact -- one XLU sublane rotate instead of a concat chain.
        if s == 0:
            return a
        return pltpu.roll(a, (-s) % a.shape[0], axis=0)

    def conv3x3(a, w_ref):
        # Per-tap accumulation: acc += roll(a, s) @ w_tap.  MXU is far from
        # saturated at these shapes; on v7x the MRB accumulates in place.
        acc = jnp.dot(shift_rows(a, shifts[0]), w_ref[0],
                      preferred_element_type=jnp.float32)
        for t in range(1, len(shifts)):
            acc = acc + jnp.dot(shift_rows(a, shifts[t]), w_ref[t],
                                preferred_element_type=jnp.float32)
        return acc * mask                                   # re-zero halo rows

    def batch_norm(a):
        # PyTorch BatchNorm2d forward (training mode, gamma=1, beta=0):
        # biased variance, eps=1e-5.  Non-interior rows of `a` are zero, so
        # plain sums divided by the interior count give exact batch stats.
        # (Single-pass E[x^2]-mean^2 is fine at these magnitudes/tolerances.)
        s1 = jnp.sum(a, axis=0, keepdims=True)
        s2 = jnp.sum(a * a, axis=0, keepdims=True)
        mean = s1 * inv_n
        var = s2 * inv_n - mean * mean
        return (a - mean) * jax.lax.rsqrt(var + eps) * mask

    # Masking invariant: every activation fed to conv3x3 has zero halo/pad
    # rows (input slab is physically zero-haloed; BN and conv3x3 re-apply the
    # mask; relu and the 1x1 matmul preserve zero rows).
    a = batch_norm(x_ref[...])                              # in_norm
    a = conv3x3(a, w_in_ref)                                # in_conv   (3x3)
    a = jnp.maximum(a, 0.0)                                 # relu
    a = conv3x3(a, w_m1_ref)                                # mid_conv1 (3x3)
    a = batch_norm(a)                                       # mid_norm
    a = jnp.maximum(a, 0.0)                                 # relu
    a = jnp.dot(a, w_m2_ref[...],
                preferred_element_type=jnp.float32)         # mid_conv2 (1x1)
    a = batch_norm(a)                                       # out_norm
    a = jnp.maximum(a, 0.0)                                 # relu
    a = conv3x3(a, w_out_ref)                               # out_conv  (3x3)
    o_ref[...] = a + b_ref[...]                             # + bias, lane-dense


# ---------------------------- one-time param pack --------------------------- #
def pack_nn_params(w_in_oihw, w_m1_oihw, w_m2_oihw, w_out_oihw, b_out, *,
                   width, cin_pad=128, co_pad_to=128):
    """Pack NN parameters into the kernel layout.  Call ONCE per parameter
    set (hoists all per-call transpose/stack/pad XLA ops out of the forward).

    `width` must be the spatial W of the inputs this parameter set will be
    applied to (it determines which 3x3 taps are statically live)."""
    cin = w_in_oihw.shape[1]
    cm = w_m1_oihw.shape[0]
    cout = w_out_oihw.shape[0]
    co_pad = ((cout + co_pad_to - 1) // co_pad_to) * co_pad_to
    taps = _live_taps(width)

    def stack_taps(w_oihw, ci_pad, co_out):
        # [Co, Ci, 3, 3] -> [T, ci_pad, co_out], zero-padded, tap order fixed
        # by _live_taps so the kernel's shift order matches.
        co, ci = w_oihw.shape[:2]
        pieces = []
        for kh, kw, _ in taps:
            t = jnp.transpose(w_oihw[:, :, kh, kw], (1, 0)).astype(jnp.float32)
            pieces.append(jnp.pad(t, ((0, ci_pad - ci), (0, co_out - co))))
        return jnp.stack(pieces, axis=0)

    return dict(
        w_in=stack_taps(w_in_oihw, cin_pad, cm),            # [T, cin_pad, Cm]
        w_m1=stack_taps(w_m1_oihw, cm, cm),                 # [T, Cm, Cm]
        w_m2=jnp.transpose(w_m2_oihw[:, :, 0, 0],
                           (1, 0)).astype(jnp.float32),     # [Cm, Cm]
        w_out=stack_taps(w_out_oihw, cm, co_pad),           # [T, Cm, Co_pad]
        b=jnp.pad(b_out.astype(jnp.float32),
                  (0, co_pad - cout)).reshape(1, co_pad),   # [1, Co_pad]
    )


# --------------------------------- forward --------------------------------- #
def nn_forward_pallas(x_nchw, params, out_channels):
    """Forward pass.  `params` comes from pack_nn_params (same `width` as x).
    Intended to be wrapped in jax.jit (out_channels static)."""
    B, Cin, H, W = x_nchw.shape
    Hp = H + 2                               # physical zero halo in H
    Wp = W if W == 1 else W + 2              # W == 1: no W halo (dead taps)
    Np = B * Hp * Wp
    Np_pad = ((Np + 7) // 8) * 8             # sublane-aligned row count
    taps = _live_taps(W)
    shifts = tuple(s for _, _, s in taps)
    cin_pad = params["w_in"].shape[1]
    co_pad = params["w_out"].shape[2]
    assert params["w_in"].shape[0] == len(shifts), "params packed for other W"

    # NCHW -> zero-haloed, lane-padded [Np_pad, cin_pad] slab.
    x = jnp.transpose(x_nchw, (0, 2, 3, 1)).astype(jnp.float32)
    wpad = (0, 0) if W == 1 else (1, 1)
    x = jnp.pad(x, ((0, 0), (1, 1), wpad, (0, cin_pad - Cin)))
    x = x.reshape(Np, cin_pad)
    x = jnp.pad(x, ((0, Np_pad - Np), (0, 0)))

    # Interior-row mask: numpy constant built at trace time (free under jit).
    m = np.zeros((B, Hp, Wp), np.float32)
    if W == 1:
        m[:, 1:H + 1, :] = 1.0
    else:
        m[:, 1:H + 1, 1:W + 1] = 1.0
    mask_np = np.zeros((Np_pad, 1), np.float32)
    mask_np[:Np, 0] = m.reshape(Np)
    mask = jnp.asarray(mask_np)

    kern = functools.partial(_nn_kernel, n_interior=B * H * W, shifts=shifts)
    vmem = pl.BlockSpec(memory_space=pltpu.MemorySpace.VMEM)
    out = pl.pallas_call(
        kern,
        out_shape=jax.ShapeDtypeStruct((Np_pad, co_pad), jnp.float32),
        in_specs=[vmem] * 7,
        out_specs=vmem,
    )(mask, x, params["w_in"], params["w_m1"], params["w_m2"],
      params["w_out"], params["b"])

    # [Np_pad, Co_pad] -> NCHW interior (bias on halo rows / pad lanes is
    # sliced away here; keep this coupling if the output layout changes).
    out = out[:Np].reshape(B, Hp, Wp, co_pad)
    if W == 1:
        out = out[:, 1:H + 1, :, :out_channels]
    else:
        out = out[:, 1:H + 1, 1:W + 1, :out_channels]
    return jnp.transpose(out, (0, 3, 1, 2))


# --------------------------- pure-JAX reference ----------------------------- #
def nn_forward_ref(x, w_in_oihw, w_m1_oihw, w_m2_oihw, w_out_oihw, b_out):
    def conv(a, wgt, pad):
        return jax.lax.conv_general_dilated(
            a, wgt, (1, 1), [(pad, pad), (pad, pad)],
            dimension_numbers=('NCHW', 'OIHW', 'NCHW'),
            precision=jax.lax.Precision.HIGHEST)

    def bn(a, eps=1e-5):
        m = jnp.mean(a, axis=(0, 2, 3), keepdims=True)
        v = jnp.mean((a - m) ** 2, axis=(0, 2, 3), keepdims=True)
        return (a - m) * jax.lax.rsqrt(v + eps)

    a = bn(x); a = conv(a, w_in_oihw, 1); a = jax.nn.relu(a)
    a = conv(a, w_m1_oihw, 1); a = bn(a); a = jax.nn.relu(a)
    a = conv(a, w_m2_oihw, 0); a = bn(a); a = jax.nn.relu(a)
    return conv(a, w_out_oihw, 1) + b_out.reshape(1, -1, 1, 1)


if __name__ == "__main__":
    # Shapes implied by NN.forward docstring: x : [B, 3, 19, 1]
    B, Cin, H, W = 2, 3, 19, 1
    Cm, Cout = 32, 6

    root = jax.random.PRNGKey(0)
    kx, k1, k2, k3, k4, k5 = jax.random.split(root, 6)

    x = jax.random.normal(kx, (B, Cin, H, W), jnp.float32)

    # Module-faithful parameter init (NN.__init__):
    w_in = 0.05 * jax.random.normal(k1, (Cm, Cin, 3, 3), jnp.float32)
    w_m1 = 0.05 * jax.random.normal(k2, (Cm, Cm, 3, 3), jnp.float32)
    w_m2 = 0.05 * jax.random.normal(k3, (Cm, Cm, 1, 1), jnp.float32)
    w_out0 = jnp.zeros((Cout, Cm, 3, 3), jnp.float32)        # nn.init.zeros_
    b_out0 = jnp.zeros((Cout,), jnp.float32)                  # nn.init.zeros_

    fwd = jax.jit(nn_forward_pallas, static_argnums=2)

    # Validate kernel vs pure-JAX reference with non-zero out_conv params
    # (the module-faithful zero init would make the comparison trivial).
    w_out_chk = 0.05 * jax.random.normal(k4, (Cout, Cm, 3, 3), jnp.float32)
    b_out_chk = 0.05 * jax.random.normal(k5, (Cout,), jnp.float32)
    params_chk = pack_nn_params(w_in, w_m1, w_m2, w_out_chk, b_out_chk, width=W)
    y_k = fwd(x, params_chk, Cout)
    y_r = nn_forward_ref(x, w_in, w_m1, w_m2, w_out_chk, b_out_chk)
    err = float(jnp.max(jnp.abs(y_k - y_r)))
    assert jnp.allclose(y_k, y_r, atol=1e-3, rtol=1e-3), err

    # Module-faithful forward pass (out_conv zero-initialized, as in __init__).
    params0 = pack_nn_params(w_in, w_m1, w_m2, w_out0, b_out0, width=W)
    y = fwd(x, params0, Cout)
    jax.block_until_ready(y)
    assert y.shape == (B, Cout, H, W)
    print("KERNEL_OK")
</pallas_src>

<mosaic_0001>
module attributes {stable_mosaic.version = 11 : i64} {
  func.func @_nn_kernel(%arg0: memref<48x1xf32, #tpu.memory_space<vmem>>, %arg1: memref<48x128xf32, #tpu.memory_space<vmem>>, %arg2: memref<3x128x32xf32, #tpu.memory_space<vmem>>, %arg3: memref<3x32x32xf32, #tpu.memory_space<vmem>>, %arg4: memref<32x32xf32, #tpu.memory_space<vmem>>, %arg5: memref<3x32x128xf32, #tpu.memory_space<vmem>>, %arg6: memref<1x128xf32, #tpu.memory_space<vmem>>, %arg7: memref<48x128xf32, #tpu.memory_space<vmem>>) attributes {dimension_semantics = [], scalar_prefetch = 0 : i64, scratch_operands = 0 : i64, tpu.core_type = #tpu.core_type<tc>} {
    %c0 = arith.constant 0 : index
    %c0_0 = arith.constant 0 : index
    %0 = vector.load %arg0[%c0, %c0_0] : memref<48x1xf32, #tpu.memory_space<vmem>>, vector<48x1xf32>
    %c0_1 = arith.constant 0 : index
    %c0_2 = arith.constant 0 : index
    %1 = vector.load %arg1[%c0_1, %c0_2] : memref<48x128xf32, #tpu.memory_space<vmem>>, vector<48x128xf32>
    %cst = arith.constant dense<0.000000e+00> : vector<128xf32>
    %2 = vector.multi_reduction <add>, %1, %cst [0] : vector<48x128xf32> to vector<128xf32>
    %3 = vector.shape_cast %2 : vector<128xf32> to vector<1x128xf32>
    %4 = arith.mulf %1, %1 : vector<48x128xf32>
    %cst_3 = arith.constant dense<0.000000e+00> : vector<128xf32>
    %5 = vector.multi_reduction <add>, %4, %cst_3 [0] : vector<48x128xf32> to vector<128xf32>
    %6 = vector.shape_cast %5 : vector<128xf32> to vector<1x128xf32>
    %cst_4 = arith.constant 0.0263157897 : f32
    %7 = vector.broadcast %cst_4 : f32 to vector<1x128xf32>
    %8 = arith.mulf %3, %7 : vector<1x128xf32>
    %cst_5 = arith.constant 0.0263157897 : f32
    %9 = vector.broadcast %cst_5 : f32 to vector<1x128xf32>
    %10 = arith.mulf %6, %9 : vector<1x128xf32>
    %11 = arith.mulf %8, %8 : vector<1x128xf32>
    %12 = arith.subf %10, %11 : vector<1x128xf32>
    %13 = vector.broadcast %8 : vector<1x128xf32> to vector<48x128xf32>
    %14 = arith.subf %1, %13 : vector<48x128xf32>
    %cst_6 = arith.constant 9.99999974E-6 : f32
    %15 = vector.broadcast %cst_6 : f32 to vector<1x128xf32>
    %16 = arith.addf %12, %15 : vector<1x128xf32>
    %17 = math.rsqrt %16 : vector<1x128xf32>
    %18 = vector.broadcast %17 : vector<1x128xf32> to vector<48x128xf32>
    %19 = arith.mulf %14, %18 : vector<48x128xf32>
    %20 = vector.broadcast %0 : vector<48x1xf32> to vector<48x128xf32>
    %21 = arith.mulf %19, %20 : vector<48x128xf32>
    %c1_i32 = arith.constant 1 : i32
    %22 = tpu.dynamic_rotate %21 by %c1_i32 dim 0 : vector<48x128xf32>, i32 -> vector<48x128xf32>
    %c0_7 = arith.constant 0 : index
    %c0_8 = arith.constant 0 : index
    %c0_9 = arith.constant 0 : index
    %23 = vector.load %arg2[%c0_7, %c0_8, %c0_9] : memref<3x128x32xf32, #tpu.memory_space<vmem>>, vector<1x128x32xf32>
    %24 = vector.shape_cast %23 : vector<1x128x32xf32> to vector<128x32xf32>
    %cst_10 = arith.constant dense<0.000000e+00> : vector<48x32xf32>
    %25 = tpu.matmul %22, %24, %cst_10 {dimension_numbers = #tpu.dot_dimension_numbers<[1], [0], [0], [1], [0, 0, 1, 1], [], []>} : vector<48x128xf32>, vector<128x32xf32>, vector<48x32xf32> -> vector<48x32xf32>
    %c1 = arith.constant 1 : index
    %c0_11 = arith.constant 0 : index
    %c0_12 = arith.constant 0 : index
    %26 = vector.load %arg2[%c1, %c0_11, %c0_12] : memref<3x128x32xf32, #tpu.memory_space<vmem>>, vector<1x128x32xf32>
    %27 = vector.shape_cast %26 : vector<1x128x32xf32> to vector<128x32xf32>
    %cst_13 = arith.constant dense<0.000000e+00> : vector<48x32xf32>
    %28 = tpu.matmul %21, %27, %cst_13 {dimension_numbers = #tpu.dot_dimension_numbers<[1], [0], [0], [1], [0, 0, 1, 1], [], []>} : vector<48x128xf32>, vector<128x32xf32>, vector<48x32xf32> -> vector<48x32xf32>
    %29 = arith.addf %25, %28 : vector<48x32xf32>
    %c47_i32 = arith.constant 47 : i32
    %30 = tpu.dynamic_rotate %21 by %c47_i32 dim 0 : vector<48x128xf32>, i32 -> vector<48x128xf32>
    %c2 = arith.constant 2 : index
    %c0_14 = arith.constant 0 : index
    %c0_15 = arith.constant 0 : index
    %31 = vector.load %arg2[%c2, %c0_14, %c0_15] : memref<3x128x32xf32, #tpu.memory_space<vmem>>, vector<1x128x32xf32>
    %32 = vector.shape_cast %31 : vector<1x128x32xf32> to vector<128x32xf32>
    %cst_16 = arith.constant dense<0.000000e+00> : vector<48x32xf32>
    %33 = tpu.matmul %30, %32, %cst_16 {dimension_numbers = #tpu.dot_dimension_numbers<[1], [0], [0], [1], [0, 0, 1, 1], [], []>} : vector<48x128xf32>, vector<128x32xf32>, vector<48x32xf32> -> vector<48x32xf32>
    %34 = arith.addf %29, %33 : vector<48x32xf32>
    %35 = vector.broadcast %0 : vector<48x1xf32> to vector<48x32xf32>
    %36 = arith.mulf %34, %35 : vector<48x32xf32>
    %cst_17 = arith.constant 0.000000e+00 : f32
    %37 = vector.broadcast %cst_17 : f32 to vector<48x32xf32>
    %38 = arith.maximumf %36, %37 : vector<48x32xf32>
    %c1_i32_18 = arith.constant 1 : i32
    %39 = tpu.dynamic_rotate %38 by %c1_i32_18 dim 0 : vector<48x32xf32>, i32 -> vector<48x32xf32>
    %c0_19 = arith.constant 0 : index
    %c0_20 = arith.constant 0 : index
    %c0_21 = arith.constant 0 : index
    %40 = vector.load %arg3[%c0_19, %c0_20, %c0_21] : memref<3x32x32xf32, #tpu.memory_space<vmem>>, vector<1x32x32xf32>
    %41 = vector.shape_cast %40 : vector<1x32x32xf32> to vector<32x32xf32>
    %cst_22 = arith.constant dense<0.000000e+00> : vector<48x32xf32>
    %42 = tpu.matmul %39, %41, %cst_22 {dimension_numbers = #tpu.dot_dimension_numbers<[1], [0], [0], [1], [0, 0, 1, 1], [], []>} : vector<48x32xf32>, vector<32x32xf32>, vector<48x32xf32> -> vector<48x32xf32>
    %c1_23 = arith.constant 1 : index
    %c0_24 = arith.constant 0 : index
    %c0_25 = arith.constant 0 : index
    %43 = vector.load %arg3[%c1_23, %c0_24, %c0_25] : memref<3x32x32xf32, #tpu.memory_space<vmem>>, vector<1x32x32xf32>
    %44 = vector.shape_cast %43 : vector<1x32x32xf32> to vector<32x32xf32>
    %cst_26 = arith.constant dense<0.000000e+00> : vector<48x32xf32>
    %45 = tpu.matmul %38, %44, %cst_26 {dimension_numbers = #tpu.dot_dimension_numbers<[1], [0], [0], [1], [0, 0, 1, 1], [], []>} : vector<48x32xf32>, vector<32x32xf32>, vector<48x32xf32> -> vector<48x32xf32>
    %46 = arith.addf %42, %45 : vector<48x32xf32>
    %c47_i32_27 = arith.constant 47 : i32
    %47 = tpu.dynamic_rotate %38 by %c47_i32_27 dim 0 : vector<48x32xf32>, i32 -> vector<48x32xf32>
    %c2_28 = arith.constant 2 : index
    %c0_29 = arith.constant 0 : index
    %c0_30 = arith.constant 0 : index
    %48 = vector.load %arg3[%c2_28, %c0_29, %c0_30] : memref<3x32x32xf32, #tpu.memory_space<vmem>>, vector<1x32x32xf32>
    %49 = vector.shape_cast %48 : vector<1x32x32xf32> to vector<32x32xf32>
    %cst_31 = arith.constant dense<0.000000e+00> : vector<48x32xf32>
    %50 = tpu.matmul %47, %49, %cst_31 {dimension_numbers = #tpu.dot_dimension_numbers<[1], [0], [0], [1], [0, 0, 1, 1], [], []>} : vector<48x32xf32>, vector<32x32xf32>, vector<48x32xf32> -> vector<48x32xf32>
    %51 = arith.addf %46, %50 : vector<48x32xf32>
    %52 = vector.broadcast %0 : vector<48x1xf32> to vector<48x32xf32>
    %53 = arith.mulf %51, %52 : vector<48x32xf32>
    %cst_32 = arith.constant dense<0.000000e+00> : vector<32xf32>
    %54 = vector.multi_reduction <add>, %53, %cst_32 [0] : vector<48x32xf32> to vector<32xf32>
    %55 = vector.shape_cast %54 : vector<32xf32> to vector<1x32xf32>
    %56 = arith.mulf %53, %53 : vector<48x32xf32>
    %cst_33 = arith.constant dense<0.000000e+00> : vector<32xf32>
    %57 = vector.multi_reduction <add>, %56, %cst_33 [0] : vector<48x32xf32> to vector<32xf32>
    %58 = vector.shape_cast %57 : vector<32xf32> to vector<1x32xf32>
    %cst_34 = arith.constant 0.0263157897 : f32
    %59 = vector.broadcast %cst_34 : f32 to vector<1x32xf32>
    %60 = arith.mulf %55, %59 : vector<1x32xf32>
    %cst_35 = arith.constant 0.0263157897 : f32
    %61 = vector.broadcast %cst_35 : f32 to vector<1x32xf32>
    %62 = arith.mulf %58, %61 : vector<1x32xf32>
    %63 = arith.mulf %60, %60 : vector<1x32xf32>
    %64 = arith.subf %62, %63 : vector<1x32xf32>
    %65 = vector.broadcast %60 : vector<1x32xf32> to vector<48x32xf32>
    %66 = arith.subf %53, %65 : vector<48x32xf32>
    %cst_36 = arith.constant 9.99999974E-6 : f32
    %67 = vector.broadcast %cst_36 : f32 to vector<1x32xf32>
    %68 = arith.addf %64, %67 : vector<1x32xf32>
    %69 = math.rsqrt %68 : vector<1x32xf32>
    %70 = vector.broadcast %69 : vector<1x32xf32> to vector<48x32xf32>
    %71 = arith.mulf %66, %70 : vector<48x32xf32>
    %72 = vector.broadcast %0 : vector<48x1xf32> to vector<48x32xf32>
    %73 = arith.mulf %71, %72 : vector<48x32xf32>
    %cst_37 = arith.constant 0.000000e+00 : f32
    %74 = vector.broadcast %cst_37 : f32 to vector<48x32xf32>
    %75 = arith.maximumf %73, %74 : vector<48x32xf32>
    %c0_38 = arith.constant 0 : index
    %c0_39 = arith.constant 0 : index
    %76 = vector.load %arg4[%c0_38, %c0_39] : memref<32x32xf32, #tpu.memory_space<vmem>>, vector<32x32xf32>
    %cst_40 = arith.constant dense<0.000000e+00> : vector<48x32xf32>
    %77 = tpu.matmul %75, %76, %cst_40 {dimension_numbers = #tpu.dot_dimension_numbers<[1], [0], [0], [1], [0, 0, 1, 1], [], []>} : vector<48x32xf32>, vector<32x32xf32>, vector<48x32xf32> -> vector<48x32xf32>
    %cst_41 = arith.constant dense<0.000000e+00> : vector<32xf32>
    %78 = vector.multi_reduction <add>, %77, %cst_41 [0] : vector<48x32xf32> to vector<32xf32>
    %79 = vector.shape_cast %78 : vector<32xf32> to vector<1x32xf32>
    %80 = arith.mulf %77, %77 : vector<48x32xf32>
    %cst_42 = arith.constant dense<0.000000e+00> : vector<32xf32>
    %81 = vector.multi_reduction <add>, %80, %cst_42 [0] : vector<48x32xf32> to vector<32xf32>
    %82 = vector.shape_cast %81 : vector<32xf32> to vector<1x32xf32>
    %cst_43 = arith.constant 0.0263157897 : f32
    %83 = vector.broadcast %cst_43 : f32 to vector<1x32xf32>
    %84 = arith.mulf %79, %83 : vector<1x32xf32>
    %cst_44 = arith.constant 0.0263157897 : f32
    %85 = vector.broadcast %cst_44 : f32 to vector<1x32xf32>
    %86 = arith.mulf %82, %85 : vector<1x32xf32>
    %87 = arith.mulf %84, %84 : vector<1x32xf32>
    %88 = arith.subf %86, %87 : vector<1x32xf32>
    %89 = vector.broadcast %84 : vector<1x32xf32> to vector<48x32xf32>
    %90 = arith.subf %77, %89 : vector<48x32xf32>
    %cst_45 = arith.constant 9.99999974E-6 : f32
    %91 = vector.broadcast %cst_45 : f32 to vector<1x32xf32>
    %92 = arith.addf %88, %91 : vector<1x32xf32>
    %93 = math.rsqrt %92 : vector<1x32xf32>
    %94 = vector.broadcast %93 : vector<1x32xf32> to vector<48x32xf32>
    %95 = arith.mulf %90, %94 : vector<48x32xf32>
    %96 = vector.broadcast %0 : vector<48x1xf32> to vector<48x32xf32>
    %97 = arith.mulf %95, %96 : vector<48x32xf32>
    %cst_46 = arith.constant 0.000000e+00 : f32
    %98 = vector.broadcast %cst_46 : f32 to vector<48x32xf32>
    %99 = arith.maximumf %97, %98 : vector<48x32xf32>
    %c1_i32_47 = arith.constant 1 : i32
    %100 = tpu.dynamic_rotate %99 by %c1_i32_47 dim 0 : vector<48x32xf32>, i32 -> vector<48x32xf32>
    %c0_48 = arith.constant 0 : index
    %c0_49 = arith.constant 0 : index
    %c0_50 = arith.constant 0 : index
    %101 = vector.load %arg5[%c0_48, %c0_49, %c0_50] : memref<3x32x128xf32, #tpu.memory_space<vmem>>, vector<1x32x128xf32>
    %102 = vector.shape_cast %101 : vector<1x32x128xf32> to vector<32x128xf32>
    %cst_51 = arith.constant dense<0.000000e+00> : vector<48x128xf32>
    %103 = tpu.matmul %100, %102, %cst_51 {dimension_numbers = #tpu.dot_dimension_numbers<[1], [0], [0], [1], [0, 0, 1, 1], [], []>} : vector<48x32xf32>, vector<32x128xf32>, vector<48x128xf32> -> vector<48x128xf32>
    %c1_52 = arith.constant 1 : index
    %c0_53 = arith.constant 0 : index
    %c0_54 = arith.constant 0 : index
    %104 = vector.load %arg5[%c1_52, %c0_53, %c0_54] : memref<3x32x128xf32, #tpu.memory_space<vmem>>, vector<1x32x128xf32>
    %105 = vector.shape_cast %104 : vector<1x32x128xf32> to vector<32x128xf32>
    %cst_55 = arith.constant dense<0.000000e+00> : vector<48x128xf32>
    %106 = tpu.matmul %99, %105, %cst_55 {dimension_numbers = #tpu.dot_dimension_numbers<[1], [0], [0], [1], [0, 0, 1, 1], [], []>} : vector<48x32xf32>, vector<32x128xf32>, vector<48x128xf32> -> vector<48x128xf32>
    %107 = arith.addf %103, %106 : vector<48x128xf32>
    %c47_i32_56 = arith.constant 47 : i32
    %108 = tpu.dynamic_rotate %99 by %c47_i32_56 dim 0 : vector<48x32xf32>, i32 -> vector<48x32xf32>
    %c2_57 = arith.constant 2 : index
    %c0_58 = arith.constant 0 : index
    %c0_59 = arith.constant 0 : index
    %109 = vector.load %arg5[%c2_57, %c0_58, %c0_59] : memref<3x32x128xf32, #tpu.memory_space<vmem>>, vector<1x32x128xf32>
    %110 = vector.shape_cast %109 : vector<1x32x128xf32> to vector<32x128xf32>
    %cst_60 = arith.constant dense<0.000000e+00> : vector<48x128xf32>
    %111 = tpu.matmul %108, %110, %cst_60 {dimension_numbers = #tpu.dot_dimension_numbers<[1], [0], [0], [1], [0, 0, 1, 1], [], []>} : vector<48x32xf32>, vector<32x128xf32>, vector<48x128xf32> -> vector<48x128xf32>
    %112 = arith.addf %107, %111 : vector<48x128xf32>
    %113 = vector.broadcast %0 : vector<48x1xf32> to vector<48x128xf32>
    %114 = arith.mulf %112, %113 : vector<48x128xf32>
    %c0_61 = arith.constant 0 : index
    %c0_62 = arith.constant 0 : index
    %115 = vector.load %arg6[%c0_61, %c0_62] : memref<1x128xf32, #tpu.memory_space<vmem>>, vector<1x128xf32>
    %116 = vector.broadcast %115 : vector<1x128xf32> to vector<48x128xf32>
    %117 = arith.addf %114, %116 : vector<48x128xf32>
    %c0_63 = arith.constant 0 : index
    %c0_64 = arith.constant 0 : index
    %118 = vector.load %arg7[%c0_63, %c0_64] : memref<48x128xf32, #tpu.memory_space<vmem>>, vector<48x128xf32>
    tpu.vector_store %arg7[%c0_63, %c0_64], %117 {strides = array<i32>} : memref<48x128xf32, #tpu.memory_space<vmem>>, vector<48x128xf32>,
    return
  }
}

</mosaic_0001>

<llo_original>
// kernel: nn_forward_pallas.1
$region0: #{nn_forward_pallas.1}
  #allocation0 [shape = 'u32[]', space=smem, size = 0x4, offset = 0x4, fixed_abs, tag = 'smem constant byte address 0x4 - core index']
  #allocation1 [shape = 'u32[72,128]{1,0:T(1,128)}', space=vmem, size = 0x9000, scoped, tag = 'internal scratch']
  %s0 = inlined_call_operand.vmem [shape: f32[48,1], index: 0, kind: input, shape index: {}]
  %s1 = inlined_call_operand.vmem [shape: f32[48,128], index: 1, kind: input, shape index: {}]
  %s2 = inlined_call_operand.vmem [shape: f32[3,128,32], index: 2, kind: input, shape index: {}]
  %s3 = inlined_call_operand.vmem [shape: f32[3,32,32], index: 3, kind: input, shape index: {}]
  %s4 = inlined_call_operand.vmem [shape: f32[32,32], index: 4, kind: input, shape index: {}]
  %s5 = inlined_call_operand.vmem [shape: f32[3,32,128], index: 5, kind: input, shape index: {}]
  %s6 = inlined_call_operand.vmem [shape: f32[1,128], index: 6, kind: input, shape index: {}]
  %s7 = inlined_call_operand.vmem [shape: f32[48,128], index: 7, kind: output, shape index: {}]
  %s8 = sld [smem:[#allocation0]]
  $region38: #{nn_forward_pallas.1} parent=0
    _
  %s10 = ssub.s32 1, %s8
  %s11 = scalar_select 0, %s10, %s8
  // Predicated region
  $region2: #{nn_forward_pallas.1} parent=0 // pred_check
    _
  $region3: #{nn_forward_pallas.1} parent=0 // pred_check_branch
    %13 = sbr.rel (0) target = $region5
  $region4: #{nn_forward_pallas.1} parent=0 // pred_region
    _
  $region5: #{nn_forward_pallas.1} parent=0 // pred_fallthru
    _
  // Predicated region
  $region6: #{nn_forward_pallas.1} parent=0 // pred_check
    _
  $region7: #{nn_forward_pallas.1} parent=0 // pred_check_branch
    %15 = sbr.rel (0) target = $region9
  $region8: #{nn_forward_pallas.1} parent=0 // pred_region
    _
  $region9: #{nn_forward_pallas.1} parent=0 // pred_fallthru
    _
  // Predicated region
  $region10: #{nn_forward_pallas.1} parent=0 // pred_check
    _
  $region11: #{nn_forward_pallas.1} parent=0 // pred_check_branch
    %17 = sbr.rel (0) target = $region13
  $region12: #{nn_forward_pallas.1} parent=0 // pred_region
    _
  $region13: #{nn_forward_pallas.1} parent=0 // pred_fallthru
    _
  // Predicated region
  $region14: #{nn_forward_pallas.1} parent=0 // pred_check
    _
  $region15: #{nn_forward_pallas.1} parent=0 // pred_check_branch
    %19 = sbr.rel (0) target = $region17
  $region16: #{nn_forward_pallas.1} parent=0 // pred_region
    _
  $region17: #{nn_forward_pallas.1} parent=0 // pred_fallthru
    _
  // Predicated region
  $region18: #{nn_forward_pallas.1} parent=0 // pred_check
    _
  $region19: #{nn_forward_pallas.1} parent=0 // pred_check_branch
    %21 = sbr.rel (0) target = $region21
  $region20: #{nn_forward_pallas.1} parent=0 // pred_region
    _
  $region21: #{nn_forward_pallas.1} parent=0 // pred_fallthru
    _
  // Predicated region
  $region22: #{nn_forward_pallas.1} parent=0 // pred_check
    _
  $region23: #{nn_forward_pallas.1} parent=0 // pred_check_branch
    %23 = sbr.rel (0) target = $region25
  $region24: #{nn_forward_pallas.1} parent=0 // pred_region
    _
  $region25: #{nn_forward_pallas.1} parent=0 // pred_fallthru
    _
  // Predicated region
  $region26: #{nn_forward_pallas.1} parent=0 // pred_check
    _
  $region27: #{nn_forward_pallas.1} parent=0 // pred_check_branch
    %25 = sbr.rel (0) target = $region29
  $region28: #{nn_forward_pallas.1} parent=0 // pred_region
    _
  $region29: #{nn_forward_pallas.1} parent=0 // pred_fallthru
    _
  %v26 = vld [vmem:[%s0] sm:$0xff]
  %v27 = vld [vmem:[%s0 + $0x8] sm:$0xff]
  %v28 = vld [vmem:[%s0 + $0x10] sm:$0xff]
  %v29 = vld [vmem:[%s0 + $0x18] sm:$0xff]
  %v30 = vld [vmem:[%s0 + $0x20] sm:$0xff]
  %v31 = vld [vmem:[%s0 + $0x28] sm:$0xff]
  %v32 = vld [vmem:[%s1] sm:$0xff]
  %v33 = vld [vmem:[%s1 + $0x8] sm:$0xff]
  %v34 = vld [vmem:[%s1 + $0x10] sm:$0xff]
  %v35 = vld [vmem:[%s1 + $0x18] sm:$0xff]
  %v36 = vld [vmem:[%s1 + $0x20] sm:$0xff]
  %v37 = vld [vmem:[%s1 + $0x28] sm:$0xff]
  %v38 = vadd.f32 %v32, %v33
  %v39 = vadd.f32 %v38, %v34
  %v40 = vadd.f32 %v39, %v35
  %v41 = vadd.f32 %v40, %v36
  %v42 = vadd.f32 %v41, %v37
  %v43 = vrot.slane %v42, 4
  %v44 = vadd.f32 %v42, %v43
  %v45 = vrot.slane %v44, 2
  %v46 = vadd.f32 %v44, %v45
  %v47 = vrot.slane %v46, 1
  %v48 = vadd.f32 %v46, %v47
  %v49 = vmul.f32 %v32, %v32
  %v50 = vmul.f32 %v33, %v33
  %v51 = vmul.f32 %v34, %v34
  %v52 = vmul.f32 %v35, %v35
  %v53 = vmul.f32 %v36, %v36
  %v54 = vmul.f32 %v37, %v37
  %v55 = vadd.f32 %v49, %v50
  %v56 = vadd.f32 %v55, %v51
  %v57 = vadd.f32 %v56, %v52
  %v58 = vadd.f32 %v57, %v53
  %v59 = vadd.f32 %v58, %v54
  %v60 = vrot.slane %v59, 4
  %v61 = vadd.f32 %v59, %v60
  %v62 = vrot.slane %v61, 2
  %v63 = vadd.f32 %v61, %v62
  %v64 = vrot.slane %v63, 1
  %v65 = vadd.f32 %v63, %v64
  %v66 = vmul.f32 %v48, 0.02631579
  %v67 = vmul.f32 %v65, 0.02631579
  %v68 = vmul.f32 %v66, %v66
  %v69 = vsub.f32 %v67, %v68
  %v70 = vsub.f32 %v32, %v66
  %v71 = vsub.f32 %v33, %v66
  %v72 = vsub.f32 %v34, %v66
  %v73 = vsub.f32 %v35, %v66
  %v74 = vsub.f32 %v36, %v66
  %v75 = vsub.f32 %v37, %v66
  %v76 = vadd.f32 %v69, 1e-05
  %v77 = vrsqrt.pop %v76
  %v78 = vmul.f32 %v77, %v76
  %v79 = vmul.f32 %v78, %v77
  %v80 = vmul.f32 0.5, %v79
  %v81 = vsub.f32 1.5, %v80
  %v82 = vmul.f32 %v77, %v81
  %vm83 = vweird.f32 %v76
  %vm84 = vweird.f32 %v77
  %vm85 = vmor %vm83, %vm84
  %v86 = vsel %vm85, %v77, %v82
  %v87 = vmul.f32 %v70, %v86
  %v88 = vmul.f32 %v71, %v86
  %v89 = vmul.f32 %v72, %v86
  %v90 = vmul.f32 %v73, %v86
  %v91 = vmul.f32 %v74, %v86
  %v92 = vmul.f32 %v75, %v86
  %94 = vset.pattern.permute.xlu0 0
  %95 = vperm.xlu0 %94, %v26
  %v96 = vpop.permute.xlu0 %95
  %99 = vset.pattern.permute.xlu0 0
  %100 = vperm.xlu0 %99, %v27
  %v101 = vpop.permute.xlu0 %100
  %104 = vset.pattern.permute.xlu0 0
  %105 = vperm.xlu0 %104, %v28
  %v106 = vpop.permute.xlu0 %105
  %109 = vset.pattern.permute.xlu0 0
  %110 = vperm.xlu0 %109, %v29
  %v111 = vpop.permute.xlu0 %110
  %114 = vset.pattern.permute.xlu0 0
  %115 = vperm.xlu0 %114, %v30
  %v116 = vpop.permute.xlu0 %115
  %119 = vset.pattern.permute.xlu0 0
  %120 = vperm.xlu0 %119, %v31
  %v121 = vpop.permute.xlu0 %120
  %v123 = vmul.f32 %v87, %v96
  %v124 = vmul.f32 %v88, %v101
  %v125 = vmul.f32 %v89, %v106
  %v126 = vmul.f32 %v90, %v111
  %v127 = vmul.f32 %v91, %v116
  %v128 = vmul.f32 %v92, %v121
  %v129 = vrot.slane %v123, 7
  %v130 = vrot.slane %v124, 7
  %v131 = vrot.slane %v125, 7
  %v132 = vrot.slane %v126, 7
  %v133 = vrot.slane %v127, 7
  %v134 = vrot.slane %v128, 7
  %v135 = vlaneseq
  %v136 = vshrl.u32 %v135, 7
  %vm137 = vcmp.lt.s32.totalorder %v136, 1
  %v138 = vsel %vm137, %v133, %v134
  %v139 = vsel %vm137, %v132, %v133
  %v140 = vsel %vm137, %v131, %v132
  %v141 = vsel %vm137, %v130, %v131
  %v142 = vsel %vm137, %v129, %v130
  %v143 = vsel %vm137, %v134, %v129
  %v144 = vld [vmem:[%s2] sm:$0xff]
  %v145 = vld [vmem:[%s2 + $0x8] sm:$0xff]
  %v146 = vld [vmem:[%s2 + $0x10] sm:$0xff]
  %v147 = vld [vmem:[%s2 + $0x18] sm:$0xff]
  %v148 = vld [vmem:[%s2 + $0x20] sm:$0xff]
  %v149 = vld [vmem:[%s2 + $0x28] sm:$0xff]
  %v150 = vld [vmem:[%s2 + $0x30] sm:$0xff]
  %v151 = vld [vmem:[%s2 + $0x38] sm:$0xff]
  %v152 = vld [vmem:[%s2 + $0x40] sm:$0xff]
  %v153 = vld [vmem:[%s2 + $0x48] sm:$0xff]
  %v154 = vld [vmem:[%s2 + $0x50] sm:$0xff]
  %v155 = vld [vmem:[%s2 + $0x58] sm:$0xff]
  %v156 = vld [vmem:[%s2 + $0x60] sm:$0xff]
  %v157 = vld [vmem:[%s2 + $0x68] sm:$0xff]
  %v158 = vld [vmem:[%s2 + $0x70] sm:$0xff]
  %v159 = vld [vmem:[%s2 + $0x78] sm:$0xff]
  %s160 = scalar_lea.vmem %s2, 128
  %v161 = vld [vmem:[%s160] sm:$0xff]
  %v162 = vld [vmem:[%s160 + $0x8] sm:$0xff]
  %v163 = vld [vmem:[%s160 + $0x10] sm:$0xff]
  %v164 = vld [vmem:[%s160 + $0x18] sm:$0xff]
  %v165 = vld [vmem:[%s160 + $0x20] sm:$0xff]
  %v166 = vld [vmem:[%s160 + $0x28] sm:$0xff]
  %v167 = vld [vmem:[%s160 + $0x30] sm:$0xff]
  %v168 = vld [vmem:[%s160 + $0x38] sm:$0xff]
  %v169 = vld [vmem:[%s160 + $0x40] sm:$0xff]
  %v170 = vld [vmem:[%s160 + $0x48] sm:$0xff]
  %v171 = vld [vmem:[%s160 + $0x50] sm:$0xff]
  %v172 = vld [vmem:[%s160 + $0x58] sm:$0xff]
  %v173 = vld [vmem:[%s160 + $0x60] sm:$0xff]
  %v174 = vld [vmem:[%s160 + $0x68] sm:$0xff]
  %v175 = vld [vmem:[%s160 + $0x70] sm:$0xff]
  %v176 = vld [vmem:[%s160 + $0x78] sm:$0xff]
  %177 = vmatpush.msra.mxu0 %v176
  %178 = vmatpush.msra.mxu0 %v175
  %179 = vmatpush.msra.mxu0 %v174
  %180 = vmatpush.msra.mxu0 %v173
  %181 = vmatpush.msra.mxu0 %v172
  %182 = vmatpush.msra.mxu0 %v171
  %183 = vmatpush.msra.mxu0 %v170
  %184 = vmatpush.msra.mxu0 %v169
  %185 = vmatpush.msra.mxu0 %v168
  %186 = vmatpush.msra.mxu0 %v167
  %187 = vmatpush.msra.mxu0 %v166
  %188 = vmatpush.msra.mxu0 %v165
  %189 = vmatpush.msra.mxu0 %v164
  %190 = vmatpush.msra.mxu0 %v163
  %191 = vmatpush.msra.mxu0 %v162
  %192 = vmatpush.msra.mxu0 %v161
  %193 = vmatmul.f32.gmra.mxu0 %v123
  %v194 = vpop.f32.mrf.mxu0
  %v195 = vadd.f32 0.0, %v194
  %196 = vmatmul.f32.gmra.mxu0 %v124
  %v197 = vpop.f32.mrf.mxu0
  %v198 = vadd.f32 0.0, %v197
  %199 = vmatmul.f32.gmra.mxu0 %v125
  %v200 = vpop.f32.mrf.mxu0
  %v201 = vadd.f32 0.0, %v200
  %202 = vmatmul.f32.gmra.mxu0 %v126
  %v203 = vpop.f32.mrf.mxu0
  %v204 = vadd.f32 0.0, %v203
  %205 = vmatmul.f32.gmra.mxu0 %v127
  %v206 = vpop.f32.mrf.mxu0
  %v207 = vadd.f32 0.0, %v206
  %208 = vmatmul.f32.gmra.mxu0 %v128
  %v209 = vpop.f32.mrf.mxu0
  %v210 = vadd.f32 0.0, %v209
  %211 = vdwg.mxu0
  %212 = vmatpush.msra.mxu0 %v159
  %213 = vmatpush.msra.mxu0 %v158
  %214 = vmatpush.msra.mxu0 %v157
  %215 = vmatpush.msra.mxu0 %v156
  %216 = vmatpush.msra.mxu0 %v155
  %217 = vmatpush.msra.mxu0 %v154
  %218 = vmatpush.msra.mxu0 %v153
  %219 = vmatpush.msra.mxu0 %v152
  %220 = vmatpush.msra.mxu0 %v151
  %221 = vmatpush.msra.mxu0 %v150
  %222 = vmatpush.msra.mxu0 %v149
  %223 = vmatpush.msra.mxu0 %v148
  %224 = vmatpush.msra.mxu0 %v147
  %225 = vmatpush.msra.mxu0 %v146
  %226 = vmatpush.msra.mxu0 %v145
  %227 = vmatpush.msra.mxu0 %v144
  %228 = vmatmul.f32.gmra.mxu0 %v143
  %v229 = vpop.f32.mrf.mxu0
  %v230 = vadd.f32 %v195, %v229
  %231 = vmatmul.f32.gmra.mxu0 %v142
  %v232 = vpop.f32.mrf.mxu0
  %v233 = vadd.f32 %v198, %v232
  %234 = vmatmul.f32.gmra.mxu0 %v141
  %v235 = vpop.f32.mrf.mxu0
  %v236 = vadd.f32 %v201, %v235
  %237 = vmatmul.f32.gmra.mxu0 %v140
  %v238 = vpop.f32.mrf.mxu0
  %v239 = vadd.f32 %v204, %v238
  %240 = vmatmul.f32.gmra.mxu0 %v139
  %v241 = vpop.f32.mrf.mxu0
  %v242 = vadd.f32 %v207, %v241
  %243 = vmatmul.f32.gmra.mxu0 %v138
  %v244 = vpop.f32.mrf.mxu0
  %v245 = vadd.f32 %v210, %v244
  %246 = vdwg.mxu0
  %v247 = vrot.slane %v123, 1
  %v248 = vrot.slane %v124, 1
  %v249 = vrot.slane %v125, 1
  %v250 = vrot.slane %v126, 1
  %v251 = vrot.slane %v127, 1
  %v252 = vrot.slane %v128, 1
  %vm253 = vcmp.lt.s32.totalorder %v136, 7
  %v254 = vsel %vm253, %v251, %v252
  %v255 = vsel %vm253, %v250, %v251
  %v256 = vsel %vm253, %v249, %v250
  %v257 = vsel %vm253, %v248, %v249
  %v258 = vsel %vm253, %v247, %v248
  %v259 = vsel %vm253, %v252, %v247
  %s260 = scalar_lea.vmem %s2, 256
  %v261 = vld [vmem:[%s260] sm:$0xff]
  %v262 = vld [vmem:[%s260 + $0x8] sm:$0xff]
  %v263 = vld [vmem:[%s260 + $0x10] sm:$0xff]
  %v264 = vld [vmem:[%s260 + $0x18] sm:$0xff]
  %v265 = vld [vmem:[%s260 + $0x20] sm:$0xff]
  %v266 = vld [vmem:[%s260 + $0x28] sm:$0xff]
  %v267 = vld [vmem:[%s260 + $0x30] sm:$0xff]
  %v268 = vld [vmem:[%s260 + $0x38] sm:$0xff]
  %v269 = vld [vmem:[%s260 + $0x40] sm:$0xff]
  %v270 = vld [vmem:[%s260 + $0x48] sm:$0xff]
  %v271 = vld [vmem:[%s260 + $0x50] sm:$0xff]
  %v272 = vld [vmem:[%s260 + $0x58] sm:$0xff]
  %v273 = vld [vmem:[%s260 + $0x60] sm:$0xff]
  %v274 = vld [vmem:[%s260 + $0x68] sm:$0xff]
  %v275 = vld [vmem:[%s260 + $0x70] sm:$0xff]
  %v276 = vld [vmem:[%s260 + $0x78] sm:$0xff]
  %277 = vmatpush.msra.mxu0 %v276
  %278 = vmatpush.msra.mxu0 %v275
  %279 = vmatpush.msra.mxu0 %v274
  %280 = vmatpush.msra.mxu0 %v273
  %281 = vmatpush.msra.mxu0 %v272
  %282 = vmatpush.msra.mxu0 %v271
  %283 = vmatpush.msra.mxu0 %v270
  %284 = vmatpush.msra.mxu0 %v269
  %285 = vmatpush.msra.mxu0 %v268
  %286 = vmatpush.msra.mxu0 %v267
  %287 = vmatpush.msra.mxu0 %v266
  %288 = vmatpush.msra.mxu0 %v265
  %289 = vmatpush.msra.mxu0 %v264
  %290 = vmatpush.msra.mxu0 %v263
  %291 = vmatpush.msra.mxu0 %v262
  %292 = vmatpush.msra.mxu0 %v261
  %293 = vmatmul.f32.gmra.mxu0 %v258
  %v294 = vpop.f32.mrf.mxu0
  %v295 = vadd.f32 0.0, %v294
  %296 = vmatmul.f32.gmra.mxu0 %v257
  %v297 = vpop.f32.mrf.mxu0
  %v298 = vadd.f32 0.0, %v297
  %299 = vmatmul.f32.gmra.mxu0 %v256
  %v300 = vpop.f32.mrf.mxu0
  %v301 = vadd.f32 0.0, %v300
  %302 = vmatmul.f32.gmra.mxu0 %v255
  %v303 = vpop.f32.mrf.mxu0
  %v304 = vadd.f32 0.0, %v303
  %305 = vmatmul.f32.gmra.mxu0 %v254
  %v306 = vpop.f32.mrf.mxu0
  %v307 = vadd.f32 0.0, %v306
  %308 = vmatmul.f32.gmra.mxu0 %v259
  %v309 = vpop.f32.mrf.mxu0
  %v310 = vadd.f32 0.0, %v309
  %311 = vdwg.mxu0
  %v312 = vadd.f32 %v230, %v295
  %v313 = vadd.f32 %v233, %v298
  %v314 = vadd.f32 %v236, %v301
  %v315 = vadd.f32 %v239, %v304
  %v316 = vadd.f32 %v242, %v307
  %v317 = vadd.f32 %v245, %v310
  %v318 = vmul.f32 %v312, %v96
  %v319 = vmul.f32 %v313, %v101
  %v320 = vmul.f32 %v314, %v106
  %v321 = vmul.f32 %v315, %v111
  %v322 = vmul.f32 %v316, %v116
  %v323 = vmul.f32 %v317, %v121
  %v324 = vmax.f32 %v318, 0.0
  %v325 = vmax.f32 %v319, 0.0
  %v326 = vmax.f32 %v320, 0.0
  %v327 = vmax.f32 %v321, 0.0
  %v328 = vmax.f32 %v322, 0.0
  %v329 = vmax.f32 %v323, 0.0
  %v330 = vrot.slane %v324, 7
  %v331 = vrot.slane %v325, 7
  %v332 = vrot.slane %v326, 7
  %v333 = vrot.slane %v327, 7
  %v334 = vrot.slane %v328, 7
  %v335 = vrot.slane %v329, 7
  %v336 = vsel %vm137, %v334, %v335
  %v337 = vsel %vm137, %v333, %v334
  %v338 = vsel %vm137, %v332, %v333
  %v339 = vsel %vm137, %v331, %v332
  %v340 = vsel %vm137, %v330, %v331
  %v341 = vsel %vm137, %v335, %v330
  %v342 = vld [vmem:[%s3] sm:$0xff]
  %v343 = vld [vmem:[%s3 + $0x8] sm:$0xff]
  %v344 = vld [vmem:[%s3 + $0x10] sm:$0xff]
  %v345 = vld [vmem:[%s3 + $0x18] sm:$0xff]
  %s346 = scalar_lea.vmem %s3, 32
  %v347 = vld [vmem:[%s346] sm:$0xff]
  %v348 = vld [vmem:[%s346 + $0x8] sm:$0xff]
  %v349 = vld [vmem:[%s346 + $0x10] sm:$0xff]
  %v350 = vld [vmem:[%s346 + $0x18] sm:$0xff]
  %vm351 = vcmask 261120
  %v353 = vsel %vm351, %v324, 0
  %v356 = vsel %vm351, %v325, 0
  %v359 = vsel %vm351, %v326, 0
  %v362 = vsel %vm351, %v327, 0
  %v365 = vsel %vm351, %v328, 0
  %v368 = vsel %vm351, %v329, 0
  %370 = vmatpush.msra.mxu0 0.0
  %371 = vmatpush.msra.mxu0 0.0
  %372 = vmatpush.msra.mxu0 0.0
  %373 = vmatpush.msra.mxu0 0.0
  %374 = vmatpush.msra.mxu0 0.0
  %375 = vmatpush.msra.mxu0 0.0
  %376 = vmatpush.msra.mxu0 0.0
  %377 = vmatpush.msra.mxu0 0.0
  %378 = vmatpush.msra.mxu0 0.0
  %379 = vmatpush.msra.mxu0 0.0
  %380 = vmatpush.msra.mxu0 0.0
  %381 = vmatpush.msra.mxu0 0.0
  %382 = vmatpush.msra.mxu0 %v350
  %383 = vmatpush.msra.mxu0 %v349
  %384 = vmatpush.msra.mxu0 %v348
  %385 = vmatpush.msra.mxu0 %v347
  %386 = vmatmul.f32.gmra.mxu0 %v353
  %v387 = vpop.f32.mrf.mxu0
  %v388 = vadd.f32 0.0, %v387
  %389 = vmatmul.f32.gmra.mxu0 %v356
  %v390 = vpop.f32.mrf.mxu0
  %v391 = vadd.f32 0.0, %v390
  %392 = vmatmul.f32.gmra.mxu0 %v359
  %v393 = vpop.f32.mrf.mxu0
  %v394 = vadd.f32 0.0, %v393
  %395 = vmatmul.f32.gmra.mxu0 %v362
  %v396 = vpop.f32.mrf.mxu0
  %v397 = vadd.f32 0.0, %v396
  %398 = vmatmul.f32.gmra.mxu0 %v365
  %v399 = vpop.f32.mrf.mxu0
  %v400 = vadd.f32 0.0, %v399
  %401 = vmatmul.f32.gmra.mxu0 %v368
  %v402 = vpop.f32.mrf.mxu0
  %v403 = vadd.f32 0.0, %v402
  %404 = vdwg.mxu0
  %v406 = vsel %vm351, %v341, 0
  %v409 = vsel %vm351, %v340, 0
  %v412 = vsel %vm351, %v339, 0
  %v415 = vsel %vm351, %v338, 0
  %v418 = vsel %vm351, %v337, 0
  %v421 = vsel %vm351, %v336, 0
  %423 = vmatpush.msra.mxu0 0.0
  %424 = vmatpush.msra.mxu0 0.0
  %425 = vmatpush.msra.mxu0 0.0
  %426 = vmatpush.msra.mxu0 0.0
  %427 = vmatpush.msra.mxu0 0.0
  %428 = vmatpush.msra.mxu0 0.0
  %429 = vmatpush.msra.mxu0 0.0
  %430 = vmatpush.msra.mxu0 0.0
  %431 = vmatpush.msra.mxu0 0.0
  %432 = vmatpush.msra.mxu0 0.0
  %433 = vmatpush.msra.mxu0 0.0
  %434 = vmatpush.msra.mxu0 0.0
  %435 = vmatpush.msra.mxu0 %v345
  %436 = vmatpush.msra.mxu0 %v344
  %437 = vmatpush.msra.mxu0 %v343
  %438 = vmatpush.msra.mxu0 %v342
  %439 = vmatmul.f32.gmra.mxu0 %v406
  %v440 = vpop.f32.mrf.mxu0
  %v441 = vadd.f32 %v388, %v440
  %442 = vmatmul.f32.gmra.mxu0 %v409
  %v443 = vpop.f32.mrf.mxu0
  %v444 = vadd.f32 %v391, %v443
  %445 = vmatmul.f32.gmra.mxu0 %v412
  %v446 = vpop.f32.mrf.mxu0
  %v447 = vadd.f32 %v394, %v446
  %448 = vmatmul.f32.gmra.mxu0 %v415
  %v449 = vpop.f32.mrf.mxu0
  %v450 = vadd.f32 %v397, %v449
  %451 = vmatmul.f32.gmra.mxu0 %v418
  %v452 = vpop.f32.mrf.mxu0
  %v453 = vadd.f32 %v400, %v452
  %454 = vmatmul.f32.gmra.mxu0 %v421
  %v455 = vpop.f32.mrf.mxu0
  %v456 = vadd.f32 %v403, %v455
  %457 = vdwg.mxu0
  %v458 = vrot.slane %v324, 1
  %v459 = vrot.slane %v325, 1
  %v460 = vrot.slane %v326, 1
  %v461 = vrot.slane %v327, 1
  %v462 = vrot.slane %v328, 1
  %v463 = vrot.slane %v329, 1
  %v464 = vsel %vm253, %v462, %v463
  %v465 = vsel %vm253, %v461, %v462
  %v466 = vsel %vm253, %v460, %v461
  %v467 = vsel %vm253, %v459, %v460
  %v468 = vsel %vm253, %v458, %v459
  %v469 = vsel %vm253, %v463, %v458
  %s470 = scalar_lea.vmem %s3, 64
  %v471 = vld [vmem:[%s470] sm:$0xff]
  %v472 = vld [vmem:[%s470 + $0x8] sm:$0xff]
  %v473 = vld [vmem:[%s470 + $0x10] sm:$0xff]
  %v474 = vld [vmem:[%s470 + $0x18] sm:$0xff]
  %v476 = vsel %vm351, %v468, 0
  %v479 = vsel %vm351, %v467, 0
  %v482 = vsel %vm351, %v466, 0
  %v485 = vsel %vm351, %v465, 0
  %v488 = vsel %vm351, %v464, 0
  %v491 = vsel %vm351, %v469, 0
  %493 = vmatpush.msra.mxu0 0.0
  %494 = vmatpush.msra.mxu0 0.0
  %495 = vmatpush.msra.mxu0 0.0
  %496 = vmatpush.msra.mxu0 0.0
  %497 = vmatpush.msra.mxu0 0.0
  %498 = vmatpush.msra.mxu0 0.0
  %499 = vmatpush.msra.mxu0 0.0
  %500 = vmatpush.msra.mxu0 0.0
  %501 = vmatpush.msra.mxu0 0.0
  %502 = vmatpush.msra.mxu0 0.0
  %503 = vmatpush.msra.mxu0 0.0
  %504 = vmatpush.msra.mxu0 0.0
  %505 = vmatpush.msra.mxu0 %v474
  %506 = vmatpush.msra.mxu0 %v473
  %507 = vmatpush.msra.mxu0 %v472
  %508 = vmatpush.msra.mxu0 %v471
  %509 = vmatmul.f32.gmra.mxu0 %v476
  %v510 = vpop.f32.mrf.mxu0
  %v511 = vadd.f32 0.0, %v510
  %512 = vmatmul.f32.gmra.mxu0 %v479
  %v513 = vpop.f32.mrf.mxu0
  %v514 = vadd.f32 0.0, %v513
  %515 = vmatmul.f32.gmra.mxu0 %v482
  %v516 = vpop.f32.mrf.mxu0
  %v517 = vadd.f32 0.0, %v516
  %518 = vmatmul.f32.gmra.mxu0 %v485
  %v519 = vpop.f32.mrf.mxu0
  %v520 = vadd.f32 0.0, %v519
  %521 = vmatmul.f32.gmra.mxu0 %v488
  %v522 = vpop.f32.mrf.mxu0
  %v523 = vadd.f32 0.0, %v522
  %524 = vmatmul.f32.gmra.mxu0 %v491
  %v525 = vpop.f32.mrf.mxu0
  %v526 = vadd.f32 0.0, %v525
  %527 = vdwg.mxu0
  %v528 = vadd.f32 %v441, %v511
  %v529 = vadd.f32 %v444, %v514
  %v530 = vadd.f32 %v447, %v517
  %v531 = vadd.f32 %v450, %v520
  %v532 = vadd.f32 %v453, %v523
  %v533 = vadd.f32 %v456, %v526
  %v534 = vmul.f32 %v528, %v96
  %v535 = vmul.f32 %v529, %v101
  %v536 = vmul.f32 %v530, %v106
  %v537 = vmul.f32 %v531, %v111
  %v538 = vmul.f32 %v532, %v116
  %v539 = vmul.f32 %v533, %v121
  %v540 = vsel %vm351, %v534, 0.0
  %v541 = vsel %vm351, %v535, 0.0
  %v542 = vadd.f32 %v540, %v541
  %v543 = vsel %vm351, %v536, 0.0
  %v544 = vadd.f32 %v542, %v543
  %v545 = vsel %vm351, %v537, 0.0
  %v546 = vadd.f32 %v544, %v545
  %v547 = vsel %vm351, %v538, 0.0
  %v548 = vadd.f32 %v546, %v547
  %v549 = vsel %vm351, %v539, 0.0
  %v550 = vadd.f32 %v548, %v549
  %v551 = vrot.slane %v550, 4
  %v552 = vadd.f32 %v550, %v551
  %v553 = vrot.slane %v552, 2
  %v554 = vadd.f32 %v552, %v553
  %v555 = vrot.slane %v554, 1
  %v556 = vadd.f32 %v554, %v555
  %v557 = vmul.f32 %v534, %v534
  %v558 = vmul.f32 %v535, %v535
  %v559 = vmul.f32 %v536, %v536
  %v560 = vmul.f32 %v537, %v537
  %v561 = vmul.f32 %v538, %v538
  %v562 = vmul.f32 %v539, %v539
  %v563 = vsel %vm351, %v557, 0.0
  %v564 = vsel %vm351, %v558, 0.0
  %v565 = vadd.f32 %v563, %v564
  %v566 = vsel %vm351, %v559, 0.0
  %v567 = vadd.f32 %v565, %v566
  %v568 = vsel %vm351, %v560, 0.0
  %v569 = vadd.f32 %v567, %v568
  %v570 = vsel %vm351, %v561, 0.0
  %v571 = vadd.f32 %v569, %v570
  %v572 = vsel %vm351, %v562, 0.0
  %v573 = vadd.f32 %v571, %v572
  %v574 = vrot.slane %v573, 4
  %v575 = vadd.f32 %v573, %v574
  %v576 = vrot.slane %v575, 2
  %v577 = vadd.f32 %v575, %v576
  %v578 = vrot.slane %v577, 1
  %v579 = vadd.f32 %v577, %v578
  %v580 = vmul.f32 %v556, 0.02631579
  %v581 = vmul.f32 %v579, 0.02631579
  %v582 = vmul.f32 %v580, %v580
  %v583 = vsub.f32 %v581, %v582
  %v584 = vsub.f32 %v534, %v580
  %v585 = vsub.f32 %v535, %v580
  %v586 = vsub.f32 %v536, %v580
  %v587 = vsub.f32 %v537, %v580
  %v588 = vsub.f32 %v538, %v580
  %v589 = vsub.f32 %v539, %v580
  %v590 = vadd.f32 %v583, 1e-05
  %v591 = vrsqrt.pop %v590
  %v592 = vmul.f32 %v591, %v590
  %v593 = vmul.f32 %v592, %v591
  %v594 = vmul.f32 0.5, %v593
  %v595 = vsub.f32 1.5, %v594
  %v596 = vmul.f32 %v591, %v595
  %vm597 = vweird.f32 %v590
  %vm598 = vweird.f32 %v591
  %vm599 = vmor %vm597, %vm598
  %v600 = vsel %vm599, %v591, %v596
  %v601 = vmul.f32 %v584, %v600
  %v602 = vmul.f32 %v585, %v600
  %v603 = vmul.f32 %v586, %v600
  %v604 = vmul.f32 %v587, %v600
  %v605 = vmul.f32 %v588, %v600
  %v606 = vmul.f32 %v589, %v600
  %v607 = vmul.f32 %v601, %v96
  %v608 = vmul.f32 %v602, %v101
  %v609 = vmul.f32 %v603, %v106
  %v610 = vmul.f32 %v604, %v111
  %v611 = vmul.f32 %v605, %v116
  %v612 = vmul.f32 %v606, %v121
  %v613 = vmax.f32 %v607, 0.0
  %v614 = vmax.f32 %v608, 0.0
  %v615 = vmax.f32 %v609, 0.0
  %v616 = vmax.f32 %v610, 0.0
  %v617 = vmax.f32 %v611, 0.0
  %v618 = vmax.f32 %v612, 0.0
  %v619 = vld [vmem:[%s4] sm:$0xff]
  %v620 = vld [vmem:[%s4 + $0x8] sm:$0xff]
  %v621 = vld [vmem:[%s4 + $0x10] sm:$0xff]
  %v622 = vld [vmem:[%s4 + $0x18] sm:$0xff]
  %v624 = vsel %vm351, %v613, 0
  %v627 = vsel %vm351, %v614, 0
  %v630 = vsel %vm351, %v615, 0
  %v633 = vsel %vm351, %v616, 0
  %v636 = vsel %vm351, %v617, 0
  %v639 = vsel %vm351, %v618, 0
  %641 = vmatpush.msra.mxu0 0.0
  %642 = vmatpush.msra.mxu0 0.0
  %643 = vmatpush.msra.mxu0 0.0
  %644 = vmatpush.msra.mxu0 0.0
  %645 = vmatpush.msra.mxu0 0.0
  %646 = vmatpush.msra.mxu0 0.0
  %647 = vmatpush.msra.mxu0 0.0
  %648 = vmatpush.msra.mxu0 0.0
  %649 = vmatpush.msra.mxu0 0.0
  %650 = vmatpush.msra.mxu0 0.0
  %651 = vmatpush.msra.mxu0 0.0
  %652 = vmatpush.msra.mxu0 0.0
  %653 = vmatpush.msra.mxu0 %v622
  %654 = vmatpush.msra.mxu0 %v621
  %655 = vmatpush.msra.mxu0 %v620
  %656 = vmatpush.msra.mxu0 %v619
  %657 = vmatmul.f32.gmra.mxu0 %v624
  %v658 = vpop.f32.mrf.mxu0
  %v659 = vadd.f32 0.0, %v658
  %660 = vmatmul.f32.gmra.mxu0 %v627
  %v661 = vpop.f32.mrf.mxu0
  %v662 = vadd.f32 0.0, %v661
  %663 = vmatmul.f32.gmra.mxu0 %v630
  %v664 = vpop.f32.mrf.mxu0
  %v665 = vadd.f32 0.0, %v664
  %666 = vmatmul.f32.gmra.mxu0 %v633
  %v667 = vpop.f32.mrf.mxu0
  %v668 = vadd.f32 0.0, %v667
  %669 = vmatmul.f32.gmra.mxu0 %v636
  %v670 = vpop.f32.mrf.mxu0
  %v671 = vadd.f32 0.0, %v670
  %672 = vmatmul.f32.gmra.mxu0 %v639
  %v673 = vpop.f32.mrf.mxu0
  %v674 = vadd.f32 0.0, %v673
  %675 = vdwg.mxu0
  %v676 = vsel %vm351, %v659, 0.0
  %v677 = vsel %vm351, %v662, 0.0
  %v678 = vadd.f32 %v676, %v677
  %v679 = vsel %vm351, %v665, 0.0
  %v680 = vadd.f32 %v678, %v679
  %v681 = vsel %vm351, %v668, 0.0
  %v682 = vadd.f32 %v680, %v681
  %v683 = vsel %vm351, %v671, 0.0
  %v684 = vadd.f32 %v682, %v683
  %v685 = vsel %vm351, %v674, 0.0
  %v686 = vadd.f32 %v684, %v685
  %v687 = vrot.slane %v686, 4
  %v688 = vadd.f32 %v686, %v687
  %v689 = vrot.slane %v688, 2
  %v690 = vadd.f32 %v688, %v689
  %v691 = vrot.slane %v690, 1
  %v692 = vadd.f32 %v690, %v691
  %v693 = vmul.f32 %v659, %v659
  %v694 = vmul.f32 %v662, %v662
  %v695 = vmul.f32 %v665, %v665
  %v696 = vmul.f32 %v668, %v668
  %v697 = vmul.f32 %v671, %v671
  %v698 = vmul.f32 %v674, %v674
  %v699 = vsel %vm351, %v693, 0.0
  %v700 = vsel %vm351, %v694, 0.0
  %v701 = vadd.f32 %v699, %v700
  %v702 = vsel %vm351, %v695, 0.0
  %v703 = vadd.f32 %v701, %v702
  %v704 = vsel %vm351, %v696, 0.0
  %v705 = vadd.f32 %v703, %v704
  %v706 = vsel %vm351, %v697, 0.0
  %v707 = vadd.f32 %v705, %v706
  %v708 = vsel %vm351, %v698, 0.0
  %v709 = vadd.f32 %v707, %v708
  %v710 = vrot.slane %v709, 4
  %v711 = vadd.f32 %v709, %v710
  %v712 = vrot.slane %v711, 2
  %v713 = vadd.f32 %v711, %v712
  %v714 = vrot.slane %v713, 1
  %v715 = vadd.f32 %v713, %v714
  %v716 = vmul.f32 %v692, 0.02631579
  %v717 = vmul.f32 %v715, 0.02631579
  %v718 = vmul.f32 %v716, %v716
  %v719 = vsub.f32 %v717, %v718
  %v720 = vsub.f32 %v659, %v716
  %v721 = vsub.f32 %v662, %v716
  %v722 = vsub.f32 %v665, %v716
  %v723 = vsub.f32 %v668, %v716
  %v724 = vsub.f32 %v671, %v716
  %v725 = vsub.f32 %v674, %v716
  %v726 = vadd.f32 %v719, 1e-05
  %v727 = vrsqrt.pop %v726
  %v728 = vmul.f32 %v727, %v726
  %v729 = vmul.f32 %v728, %v727
  %v730 = vmul.f32 0.5, %v729
  %v731 = vsub.f32 1.5, %v730
  %v732 = vmul.f32 %v727, %v731
  %vm733 = vweird.f32 %v726
  %vm734 = vweird.f32 %v727
  %vm735 = vmor %vm733, %vm734
  %v736 = vsel %vm735, %v727, %v732
  %v737 = vmul.f32 %v720, %v736
  %v738 = vmul.f32 %v721, %v736
  %v739 = vmul.f32 %v722, %v736
  %v740 = vmul.f32 %v723, %v736
  %v741 = vmul.f32 %v724, %v736
  %v742 = vmul.f32 %v725, %v736
  %v743 = vmul.f32 %v737, %v96
  %v744 = vmul.f32 %v738, %v101
  %v745 = vmul.f32 %v739, %v106
  %v746 = vmul.f32 %v740, %v111
  %v747 = vmul.f32 %v741, %v116
  %v748 = vmul.f32 %v742, %v121
  %v749 = vmax.f32 %v743, 0.0
  %v750 = vmax.f32 %v744, 0.0
  %v751 = vmax.f32 %v745, 0.0
  %v752 = vmax.f32 %v746, 0.0
  %v753 = vmax.f32 %v747, 0.0
  %v754 = vmax.f32 %v748, 0.0
  %v755 = vrot.slane %v749, 7
  %v756 = vrot.slane %v750, 7
  %v757 = vrot.slane %v751, 7
  %v758 = vrot.slane %v752, 7
  %v759 = vrot.slane %v753, 7
  %v760 = vrot.slane %v754, 7
  %v761 = vsel %vm137, %v759, %v760
  %v762 = vsel %vm137, %v758, %v759
  %v763 = vsel %vm137, %v757, %v758
  %v764 = vsel %vm137, %v756, %v757
  %v765 = vsel %vm137, %v755, %v756
  %v766 = vsel %vm137, %v760, %v755
  %v767 = vld [vmem:[%s5] sm:$0xff]
  %v768 = vld [vmem:[%s5 + $0x8] sm:$0xff]
  %v769 = vld [vmem:[%s5 + $0x10] sm:$0xff]
  %v770 = vld [vmem:[%s5 + $0x18] sm:$0xff]
  %s771 = scalar_lea.vmem %s5, 32
  %v772 = vld [vmem:[%s771] sm:$0xff]
  %v773 = vld [vmem:[%s771 + $0x8] sm:$0xff]
  %v774 = vld [vmem:[%s771 + $0x10] sm:$0xff]
  %v775 = vld [vmem:[%s771 + $0x18] sm:$0xff]
  %v777 = vsel %vm351, %v749, 0
  %v780 = vsel %vm351, %v750, 0
  %v783 = vsel %vm351, %v751, 0
  %v786 = vsel %vm351, %v752, 0
  %v789 = vsel %vm351, %v753, 0
  %v792 = vsel %vm351, %v754, 0
  %794 = vmatpush.msra.mxu0 0.0
  %795 = vmatpush.msra.mxu0 0.0
  %796 = vmatpush.msra.mxu0 0.0
  %797 = vmatpush.msra.mxu0 0.0
  %798 = vmatpush.msra.mxu0 0.0
  %799 = vmatpush.msra.mxu0 0.0
  %800 = vmatpush.msra.mxu0 0.0
  %801 = vmatpush.msra.mxu0 0.0
  %802 = vmatpush.msra.mxu0 0.0
  %803 = vmatpush.msra.mxu0 0.0
  %804 = vmatpush.msra.mxu0 0.0
  %805 = vmatpush.msra.mxu0 0.0
  %806 = vmatpush.msra.mxu0 %v775
  %807 = vmatpush.msra.mxu0 %v774
  %808 = vmatpush.msra.mxu0 %v773
  %809 = vmatpush.msra.mxu0 %v772
  %810 = vmatmul.f32.gmra.mxu0 %v777
  %v811 = vpop.f32.mrf.mxu0
  %v812 = vadd.f32 0.0, %v811
  %813 = vmatmul.f32.gmra.mxu0 %v780
  %v814 = vpop.f32.mrf.mxu0
  %v815 = vadd.f32 0.0, %v814
  %816 = vmatmul.f32.gmra.mxu0 %v783
  %v817 = vpop.f32.mrf.mxu0
  %v818 = vadd.f32 0.0, %v817
  %819 = vmatmul.f32.gmra.mxu0 %v786
  %v820 = vpop.f32.mrf.mxu0
  %v821 = vadd.f32 0.0, %v820
  %822 = vmatmul.f32.gmra.mxu0 %v789
  %v823 = vpop.f32.mrf.mxu0
  %v824 = vadd.f32 0.0, %v823
  %825 = vmatmul.f32.gmra.mxu0 %v792
  %v826 = vpop.f32.mrf.mxu0
  %v827 = vadd.f32 0.0, %v826
  %828 = vdwg.mxu0
  %v830 = vsel %vm351, %v766, 0
  %v833 = vsel %vm351, %v765, 0
  %v836 = vsel %vm351, %v764, 0
  %v839 = vsel %vm351, %v763, 0
  %v842 = vsel %vm351, %v762, 0
  %v845 = vsel %vm351, %v761, 0
  %847 = vmatpush.msra.mxu0 0.0
  %848 = vmatpush.msra.mxu0 0.0
  %849 = vmatpush.msra.mxu0 0.0
  %850 = vmatpush.msra.mxu0 0.0
  %851 = vmatpush.msra.mxu0 0.0
  %852 = vmatpush.msra.mxu0 0.0
  %853 = vmatpush.msra.mxu0 0.0
  %854 = vmatpush.msra.mxu0 0.0
  %855 = vmatpush.msra.mxu0 0.0
  %856 = vmatpush.msra.mxu0 0.0
  %857 = vmatpush.msra.mxu0 0.0
  %858 = vmatpush.msra.mxu0 0.0
  %859 = vmatpush.msra.mxu0 %v770
  %860 = vmatpush.msra.mxu0 %v769
  %861 = vmatpush.msra.mxu0 %v768
  %862 = vmatpush.msra.mxu0 %v767
  %863 = vmatmul.f32.gmra.mxu0 %v830
  %v864 = vpop.f32.mrf.mxu0
  %v865 = vadd.f32 %v812, %v864
  %866 = vmatmul.f32.gmra.mxu0 %v833
  %v867 = vpop.f32.mrf.mxu0
  %v868 = vadd.f32 %v815, %v867
  %869 = vmatmul.f32.gmra.mxu0 %v836
  %v870 = vpop.f32.mrf.mxu0
  %v871 = vadd.f32 %v818, %v870
  %872 = vmatmul.f32.gmra.mxu0 %v839
  %v873 = vpop.f32.mrf.mxu0
  %v874 = vadd.f32 %v821, %v873
  %875 = vmatmul.f32.gmra.mxu0 %v842
  %v876 = vpop.f32.mrf.mxu0
  %v877 = vadd.f32 %v824, %v876
  %878 = vmatmul.f32.gmra.mxu0 %v845
  %v879 = vpop.f32.mrf.mxu0
  %v880 = vadd.f32 %v827, %v879
  %881 = vdwg.mxu0
  %v882 = vrot.slane %v749, 1
  %v883 = vrot.slane %v750, 1
  %v884 = vrot.slane %v751, 1
  %v885 = vrot.slane %v752, 1
  %v886 = vrot.slane %v753, 1
  %v887 = vrot.slane %v754, 1
  %v888 = vsel %vm253, %v886, %v887
  %v889 = vsel %vm253, %v885, %v886
  %v890 = vsel %vm253, %v884, %v885
  %v891 = vsel %vm253, %v883, %v884
  %v892 = vsel %vm253, %v882, %v883
  %v893 = vsel %vm253, %v887, %v882
  %s894 = scalar_lea.vmem %s5, 64
  %v895 = vld [vmem:[%s894] sm:$0xff]
  %v896 = vld [vmem:[%s894 + $0x8] sm:$0xff]
  %v897 = vld [vmem:[%s894 + $0x10] sm:$0xff]
  %v898 = vld [vmem:[%s894 + $0x18] sm:$0xff]
  %v900 = vsel %vm351, %v892, 0
  %v903 = vsel %vm351, %v891, 0
  %v906 = vsel %vm351, %v890, 0
  %v909 = vsel %vm351, %v889, 0
  %v912 = vsel %vm351, %v888, 0
  %v915 = vsel %vm351, %v893, 0
  %917 = vmatpush.msra.mxu0 0.0
  %918 = vmatpush.msra.mxu0 0.0
  %919 = vmatpush.msra.mxu0 0.0
  %920 = vmatpush.msra.mxu0 0.0
  %921 = vmatpush.msra.mxu0 0.0
  %922 = vmatpush.msra.mxu0 0.0
  %923 = vmatpush.msra.mxu0 0.0
  %924 = vmatpush.msra.mxu0 0.0
  %925 = vmatpush.msra.mxu0 0.0
  %926 = vmatpush.msra.mxu0 0.0
  %927 = vmatpush.msra.mxu0 0.0
  %928 = vmatpush.msra.mxu0 0.0
  %929 = vmatpush.msra.mxu0 %v898
  %930 = vmatpush.msra.mxu0 %v897
  %931 = vmatpush.msra.mxu0 %v896
  %932 = vmatpush.msra.mxu0 %v895
  %933 = vmatmul.f32.gmra.mxu0 %v900
  %v934 = vpop.f32.mrf.mxu0
  %v935 = vadd.f32 0.0, %v934
  %936 = vmatmul.f32.gmra.mxu0 %v903
  %v937 = vpop.f32.mrf.mxu0
  %v938 = vadd.f32 0.0, %v937
  %939 = vmatmul.f32.gmra.mxu0 %v906
  %v940 = vpop.f32.mrf.mxu0
  %v941 = vadd.f32 0.0, %v940
  %942 = vmatmul.f32.gmra.mxu0 %v909
  %v943 = vpop.f32.mrf.mxu0
  %v944 = vadd.f32 0.0, %v943
  %945 = vmatmul.f32.gmra.mxu0 %v912
  %v946 = vpop.f32.mrf.mxu0
  %v947 = vadd.f32 0.0, %v946
  %948 = vmatmul.f32.gmra.mxu0 %v915
  %v949 = vpop.f32.mrf.mxu0
  %v950 = vadd.f32 0.0, %v949
  %951 = vdwg.mxu0
  %v952 = vadd.f32 %v865, %v935
  %v953 = vadd.f32 %v868, %v938
  %v954 = vadd.f32 %v871, %v941
  %v955 = vadd.f32 %v874, %v944
  %v956 = vadd.f32 %v877, %v947
  %v957 = vadd.f32 %v880, %v950
  %v958 = vmul.f32 %v952, %v96
  %v959 = vmul.f32 %v953, %v101
  %v960 = vmul.f32 %v954, %v106
  %v961 = vmul.f32 %v955, %v111
  %v962 = vmul.f32 %v956, %v116
  %v963 = vmul.f32 %v957, %v121
  %v964 = vld [vmem:[%s6] sm:$0x1]
  %v966 = vperm.slane %v964, 0
  %v968 = vadd.f32 %v958, %v966
  %v969 = vadd.f32 %v959, %v966
  %v970 = vadd.f32 %v960, %v966
  %v971 = vadd.f32 %v961, %v966
  %v972 = vadd.f32 %v962, %v966
  %v973 = vadd.f32 %v963, %v966
  %974 = vst [vmem:[%s7] sm:$0xff] %v968
  %975 = vst [vmem:[%s7 + $0x8] sm:$0xff] %v969
  %976 = vst [vmem:[%s7 + $0x10] sm:$0xff] %v970
  %977 = vst [vmem:[%s7 + $0x18] sm:$0xff] %v971
  %978 = vst [vmem:[%s7 + $0x20] sm:$0xff] %v972
  %979 = vst [vmem:[%s7 + $0x28] sm:$0xff] %v973
  // Predicated region
  $region30: #{nn_forward_pallas.1} parent=0 // pred_check
    _
  $region31: #{nn_forward_pallas.1} parent=0 // pred_check_branch
    %981 = sbr.rel (0) target = $region33
  $region32: #{nn_forward_pallas.1} parent=0 // pred_region
    _
  $region33: #{nn_forward_pallas.1} parent=0 // pred_fallthru
    _
  // Predicated region
  $region34: #{nn_forward_pallas.1} parent=0 // pred_check
    _
  $region35: #{nn_forward_pallas.1} parent=0 // pred_check_branch
    %983 = sbr.rel (0) target = $region37
  $region36: #{nn_forward_pallas.1} parent=0 // pred_region
    _
  $region37: #{nn_forward_pallas.1} parent=0 // pred_fallthru
    _

</llo_original>
